<compile_context>
chip_gen: v7x
topology: tpu7x:2x2x1
jax: 0.10.0
libtpu: 0.0.40
codegen_flags: <defaults>
</compile_context>

<pallas_src>
import functools

import jax
import jax.numpy as jnp
from jax.experimental import pallas as pl
from jax.experimental.pallas import tpu as pltpu


def _linear_kernel(x_ref, w_ref, b_ref, o_ref):
    # Hot path: one MXU matmul per (row-tile, col-tile) + f32 bias broadcast-add.
    acc = jnp.dot(x_ref[...], w_ref[...], preferred_element_type=jnp.float32)
    o_ref[...] = (acc + b_ref[...]).astype(o_ref.dtype)


def _round_up(x, m):
    return (x + m - 1) // m * m


def _block_vmem_bytes(tile_m, tile_n, in_dim, compute_bytes):
    """Double-buffered VMEM footprint of one grid step's blocks (bias/out are f32)."""
    x_blk = tile_m * in_dim * compute_bytes
    w_blk = in_dim * tile_n * compute_bytes
    b_blk = tile_n * 4
    o_blk = tile_m * tile_n * 4
    return 2 * (x_blk + w_blk + b_blk + o_blk)


@functools.partial(jax.jit, static_argnames=("tile_m", "tile_n", "compute_dtype"))
def logistic_regression_forward(
    x, weight_t, bias, *, tile_m=512, tile_n=256, compute_dtype=jnp.bfloat16
):
    """Forward of LogisticRegression: logits = x @ weight_t + bias.

    x:        (N, in_dim)
    weight_t: (in_dim, out_dim)  -- pre-transposed nn.Linear weight (stored this way)
    bias:     (out_dim,)
    compute_dtype: bf16 (default, native MXU path, f32 accumulation) or f32 for
                   bit-level parity with the PyTorch reference.
    """
    n, in_dim = x.shape
    out_dim = weight_t.shape[1]
    compute_bytes = jnp.dtype(compute_dtype).itemsize

    # ---- Row-tile selection -------------------------------------------------
    # Large row tiles amortize per-grid-step overhead; but keep >=2 row tiles at
    # production batch sizes so both v7x TensorCores receive work.
    if n <= tile_m:
        tile_m = _round_up(pl.cdiv(n, 2), 8) if n >= 256 else n

    # ---- Column-tile selection ----------------------------------------------
    budget = 48 * 1024 * 1024  # double-buffered block budget; safe within v7x 64 MiB
    if _block_vmem_bytes(tile_m, out_dim, in_dim, compute_bytes) <= budget:
        # Full-out_dim weight slab: weight block index is constant over the whole
        # grid -> the weight is DMA'd from HBM exactly once.
        tile_n = out_dim
    else:
        tile_n = max(128, min(tile_n, 256))  # lane-dense multiple of 128
        while _block_vmem_bytes(tile_m, tile_n, in_dim, compute_bytes) > budget:
            if tile_m > 128:
                tile_m = _round_up(tile_m // 2, 8)
            elif tile_n > 128:
                tile_n = _round_up(tile_n // 2, 128)
            else:
                # TODO(synk): K-tiled accumulator path (3rd "arbitrary" grid axis +
                # f32 VMEM scratch + pl.when init/finalize) for in_dim so large that
                # full-K blocks at minimal tiles exceed the VMEM budget.
                break

    grid = (pl.cdiv(n, tile_m), pl.cdiv(out_dim, tile_n))

    # Size the scoped-VMEM cap from the real footprint instead of the physical max.
    block_bytes = _block_vmem_bytes(tile_m, tile_n, in_dim, compute_bytes)
    vmem_limit = min(max(block_bytes + 8 * 1024 * 1024, 16 * 1024 * 1024),
                     112 * 1024 * 1024)

    x_c = x.astype(compute_dtype)          # keep bf16 upstream to avoid this HBM pass
    w_c = weight_t.astype(compute_dtype)   # persist the weight in compute_dtype upstream
    b_c = bias.reshape(1, -1).astype(jnp.float32)

    out = pl.pallas_call(
        _linear_kernel,
        out_shape=jax.ShapeDtypeStruct((n, out_dim), jnp.float32),
        grid_spec=pltpu.PrefetchScalarGridSpec(
            num_scalar_prefetch=0,
            grid=grid,
            in_specs=[
                # x row tile: block index invariant along j -> stays resident while
                # sweeping output-column tiles.
                pl.BlockSpec((tile_m, in_dim), lambda i, j: (i, 0)),
                # weight column slab: invariant along i (and over the whole grid when
                # tile_n == out_dim, i.e. fetched exactly once).
                pl.BlockSpec((in_dim, tile_n), lambda i, j: (0, j)),
                # bias row for this column slab.
                pl.BlockSpec((1, tile_n), lambda i, j: (0, j)),
            ],
            out_specs=pl.BlockSpec((tile_m, tile_n), lambda i, j: (i, j)),
        ),
        compiler_params=pltpu.CompilerParams(
            # Both grid axes are independent -> megacore sharding on v7x.
            dimension_semantics=("parallel", "parallel"),
            vmem_limit_bytes=vmem_limit,
        ),
    )(x_c, w_c, b_c)

    return out


def init_params(key, in_dim, out_dim):
    # Match weights_init: xavier_uniform_ on weight, zeros on bias.  The weight is
    # persisted directly in (in_dim, out_dim) layout (== W^T of the PyTorch param) so
    # no per-call transpose is needed; xavier_uniform_'s bound is symmetric in
    # fan_in/fan_out so the distribution is identical.  For production, store it in
    # bf16 so the forward-path cast is a no-op.
    bound = (6.0 / (in_dim + out_dim)) ** 0.5
    w_t = jax.random.uniform(key, (in_dim, out_dim), jnp.float32, -bound, bound)
    b = jnp.zeros((out_dim,), jnp.float32)
    return w_t, b


if __name__ == "__main__":
    key = jax.random.PRNGKey(0)
    k_x, k_w = jax.random.split(key)

    batch, in_dim, out_dim = 8, 32, 4
    x = jax.random.normal(k_x, (batch, in_dim), jnp.float32)
    w_t, b = init_params(k_w, in_dim, out_dim)  # (in_dim, out_dim), pre-transposed

    ref = x @ w_t + b  # plain-JAX reference of fc(x) = x @ W^T + b

    # Default bf16 MXU path (f32 accumulation): loose tolerance vs f32 reference.
    out_bf16 = logistic_regression_forward(x, w_t, b)
    jax.block_until_ready(out_bf16)
    assert out_bf16.shape == (batch, out_dim)
    assert jnp.allclose(out_bf16, ref, atol=5e-2, rtol=5e-2)

    # f32 parity path: matches the PyTorch reference to tight tolerance.
    out_f32 = logistic_regression_forward(x, w_t, b, compute_dtype=jnp.float32)
    jax.block_until_ready(out_f32)
    assert jnp.allclose(out_f32, ref, atol=1e-5, rtol=1e-5)

    print("KERNEL_OK")
</pallas_src>

<mosaic_0001>
module attributes {stable_mosaic.version = 11 : i64} {
  func.func @_linear_kernel(%arg0: i32, %arg1: i32, %arg2: memref<8x32xbf16, #tpu.memory_space<vmem>>, %arg3: memref<32x4xbf16, #tpu.memory_space<vmem>>, %arg4: memref<1x4xf32, #tpu.memory_space<vmem>>, %arg5: memref<8x4xf32, #tpu.memory_space<vmem>>) attributes {dimension_semantics = [#tpu.dimension_semantics<parallel>, #tpu.dimension_semantics<parallel>], iteration_bounds = array<i64: 1, 1>, scalar_prefetch = 0 : i64, scratch_operands = 0 : i64, tpu.core_type = #tpu.core_type<tc>, window_params = [{transform_indices = @transform_0, window_bounds = array<i64: 8, 32>}, {transform_indices = @transform_1, window_bounds = array<i64: 32, 4>}, {transform_indices = @transform_2, window_bounds = array<i64: 1, 4>}, {transform_indices = @transform_3, window_bounds = array<i64: 8, 4>}]} {
    %c0 = arith.constant 0 : index
    %c0_0 = arith.constant 0 : index
    %0 = vector.load %arg2[%c0, %c0_0] : memref<8x32xbf16, #tpu.memory_space<vmem>>, vector<8x32xbf16>
    %c0_1 = arith.constant 0 : index
    %c0_2 = arith.constant 0 : index
    %1 = vector.load %arg3[%c0_1, %c0_2] : memref<32x4xbf16, #tpu.memory_space<vmem>>, vector<32x4xbf16>
    %cst = arith.constant dense<0.000000e+00> : vector<8x4xf32>
    %2 = tpu.matmul %0, %1, %cst {dimension_numbers = #tpu.dot_dimension_numbers<[1], [0], [0], [1], [0, 0, 1, 1], [], []>} : vector<8x32xbf16>, vector<32x4xbf16>, vector<8x4xf32> -> vector<8x4xf32>
    %c0_3 = arith.constant 0 : index
    %c0_4 = arith.constant 0 : index
    %3 = vector.load %arg4[%c0_3, %c0_4] : memref<1x4xf32, #tpu.memory_space<vmem>>, vector<1x4xf32>
    %4 = vector.broadcast %3 : vector<1x4xf32> to vector<8x4xf32>
    %5 = arith.addf %2, %4 : vector<8x4xf32>
    %c0_5 = arith.constant 0 : index
    %c0_6 = arith.constant 0 : index
    %6 = vector.load %arg5[%c0_5, %c0_6] : memref<8x4xf32, #tpu.memory_space<vmem>>, vector<8x4xf32>
    tpu.vector_store %arg5[%c0_5, %c0_6], %5 {strides = array<i32>} : memref<8x4xf32, #tpu.memory_space<vmem>>, vector<8x4xf32>,
    return
  }
  func.func @transform_0(%arg0: i32, %arg1: i32) -> (i32, i32) {
    %c0_i32 = arith.constant 0 : i32
    %c0_i32_0 = arith.constant 0 : i32
    return %arg0, %c0_i32 : i32, i32
  }
  func.func @transform_1(%arg0: i32, %arg1: i32) -> (i32, i32) {
    %c0_i32 = arith.constant 0 : i32
    %c0_i32_0 = arith.constant 0 : i32
    return %c0_i32, %arg1 : i32, i32
  }
  func.func @transform_2(%arg0: i32, %arg1: i32) -> (i32, i32) {
    %c0_i32 = arith.constant 0 : i32
    %c0_i32_0 = arith.constant 0 : i32
    return %c0_i32, %arg1 : i32, i32
  }
  func.func @transform_3(%arg0: i32, %arg1: i32) -> (i32, i32) {
    %c0_i32 = arith.constant 0 : i32
    return %arg0, %arg1 : i32, i32
  }
}

</mosaic_0001>

<llo_original>
// kernel: logistic_regression_forward.1
$region0: #{logistic_regression_forward.1}
  #allocation0 [shape = 'u32[]', space=smem, size = 0x4, offset = 0x4, fixed_abs, tag = 'smem constant byte address 0x4 - core index']
  #allocation1 [shape = 'u32[144,128]{1,0:T(1,128)}', space=vmem, size = 0x12000, scoped, tag = 'internal scratch']
  %s0 = inlined_call_operand.vmem [shape: bf16[8,32], index: 0, kind: input, shape index: {}]
  %s1 = inlined_call_operand.vmem [shape: bf16[32,4], index: 1, kind: input, shape index: {}]
  %s2 = inlined_call_operand.vmem [shape: f32[1,4], index: 2, kind: input, shape index: {}]
  %s3 = inlined_call_operand.vmem [shape: f32[8,4], index: 3, kind: output, shape index: {}]
  %s4 = sld [smem:[#allocation0]]
  $region22: #{logistic_regression_forward.1} parent=0
    _
  %s6 = ssub.s32 1, %s4
  %s7 = scalar_select 0, %s6, %s4
  // Predicated region
  $region2: #{logistic_regression_forward.1} parent=0 // pred_check
    _
  $region3: #{logistic_regression_forward.1} parent=0 // pred_check_branch
    %9 = sbr.rel (0) target = $region5
  $region4: #{logistic_regression_forward.1} parent=0 // pred_region
    _
  $region5: #{logistic_regression_forward.1} parent=0 // pred_fallthru
    _
  // Predicated region
  $region6: #{logistic_regression_forward.1} parent=0 // pred_check
    _
  $region7: #{logistic_regression_forward.1} parent=0 // pred_check_branch
    %11 = sbr.rel (0) target = $region9
  $region8: #{logistic_regression_forward.1} parent=0 // pred_region
    _
  $region9: #{logistic_regression_forward.1} parent=0 // pred_fallthru
    _
  // Predicated region
  $region10: #{logistic_regression_forward.1} parent=0 // pred_check
    _
  $region11: #{logistic_regression_forward.1} parent=0 // pred_check_branch
    %13 = sbr.rel (0) target = $region13
  $region12: #{logistic_regression_forward.1} parent=0 // pred_region
    _
  $region13: #{logistic_regression_forward.1} parent=0 // pred_fallthru
    _
  %v15 = vld [vmem:[%s0] sm:$0xf]
  %v16 = vld [vmem:[%s1] sm:$0xf]
  %v17 = vld [vmem:[%s1 + $0x4] sm:$0xf]
  %v18 = vld [vmem:[%s1 + $0x8] sm:$0xf]
  %v19 = vld [vmem:[%s1 + $0xc] sm:$0xf]
  %v20 = vld [vmem:[%s2] sm:$0x1]
  %v22 = vlaneseq
  %v23 = vshrl.u32 %v22, 7
  %v24 = vsub.s32 0, %v23
  %v25 = vrot.slane %v20, %v24
  %v31 = vunpack.c.l.b16 %v16
  %v32 = vunpack.c.l.b16 %v17
  %v33 = vunpack.c.l.b16 %v18
  %v34 = vunpack.c.l.b16 %v19
  %v35 = vpack.c.b16 %v32, %v31
  %v36 = vpack.c.b16 %v34, %v33
  %vm39 = vcmask 261120
  %v41 = vsel %vm39, %v15, 0
  %43 = vmatprep.subr.bf16.mxu0 0
  %44 = vmatpush1.bf16.msra.mxu0 %v35
  %45 = vmatprep.subr.bf16.mxu0 0
  %46 = vmatpush1.bf16.msra.mxu0 %v36
  %47 = vmatprep.subr.bf16.mxu0 0
  %48 = vmatpush1.bf16.msra.mxu0 0
  %49 = vmatprep.subr.bf16.mxu0 0
  %50 = vmatpush1.bf16.msra.mxu0 0
  %51 = vmatprep.subr.bf16.mxu0 0
  %52 = vmatpush1.bf16.msra.mxu0 0
  %53 = vmatprep.subr.bf16.mxu0 0
  %54 = vmatpush1.bf16.msra.mxu0 0
  %55 = vmatprep.subr.bf16.mxu0 0
  %56 = vmatpush1.bf16.msra.mxu0 0
  %57 = vmatprep.subr.bf16.mxu0 0
  %58 = vmatpush1.bf16.msra.mxu0 0
  %59 = vmatprep.subr.bf16.mxu0 0
  %60 = vmatpush1.bf16.msra.mxu0 0
  %61 = vmatprep.subr.bf16.mxu0 0
  %62 = vmatpush1.bf16.msra.mxu0 0
  %63 = vmatprep.subr.bf16.mxu0 0
  %64 = vmatpush1.bf16.msra.mxu0 0
  %65 = vmatprep.subr.bf16.mxu0 0
  %66 = vmatpush1.bf16.msra.mxu0 0
  %67 = vmatprep.subr.bf16.mxu0 0
  %68 = vmatpush1.bf16.msra.mxu0 0
  %69 = vmatprep.subr.bf16.mxu0 0
  %70 = vmatpush1.bf16.msra.mxu0 0
  %71 = vmatprep.subr.bf16.mxu0 0
  %72 = vmatpush1.bf16.msra.mxu0 0
  %73 = vmatprep.subr.bf16.mxu0 0
  %74 = vmatpush1.bf16.msra.mxu0 0
  %75 = vmatprep.mubr.bf16.mxu0 0
  %76 = vmatmul.mubr.bf16.gmra.mrb[0].mxu0 %v41
  %v77 = vpop.f32.mrb[0].mxu0
  %v78 = vadd.f32 %v25, %v77
  %v79 = vpop.f32.mrb[0].mxu0
  %v80 = vpop.f32.mrb[0].mxu0
  %v81 = vpop.f32.mrb[0].mxu0
  %82 = vdwg.mxu0
  %vm83 = vcmask 31744
  %84 = vst.msk [vmem:[%s3] sm:$0xff] %vm83, %v78
  // Predicated region
  $region14: #{logistic_regression_forward.1} parent=0 // pred_check
    _
  $region15: #{logistic_regression_forward.1} parent=0 // pred_check_branch
    %86 = sbr.rel (0) target = $region17
  $region16: #{logistic_regression_forward.1} parent=0 // pred_region
    _
  $region17: #{logistic_regression_forward.1} parent=0 // pred_fallthru
    _
  // Predicated region
  $region18: #{logistic_regression_forward.1} parent=0 // pred_check
    _
  $region19: #{logistic_regression_forward.1} parent=0 // pred_check_branch
    %88 = sbr.rel (0) target = $region21
  $region20: #{logistic_regression_forward.1} parent=0 // pred_region
    _
  $region21: #{logistic_regression_forward.1} parent=0 // pred_fallthru
    _

</llo_original>
